<compile_context>
chip_gen: v7x
topology: tpu7x:2x2x1
jax: 0.10.0
libtpu: 0.0.40
codegen_flags: <defaults>
</compile_context>

<pallas_src>
import functools

import jax
import jax.numpy as jnp
from jax.experimental import pallas as pl
from jax.experimental.pallas import tpu as pltpu

N_BRUNCH = 6
N_OUT = 2


def _round_up(n: int, m: int) -> int:
    return ((n + m - 1) // m) * m


def _batch_axis_semantics():
    """CORE_PARALLEL on v7x (2 TensorCores/chip), plain 'parallel' elsewhere."""
    try:
        kind = jax.devices()[0].device_kind.lower()
    except Exception:  # defensive: never fail the build on a device query
        kind = ""
    if "v7" in kind or "7x" in kind:
        return (pltpu.CORE_PARALLEL,)
    return ("parallel",)


def consequent_kernel(x_ref, w_ref, b_ref, o_ref):
    # x_ref : (TB, K)     VMEM  lane-dense input block (bf16 or f32)
    # w_ref : (K, N_OUT)  VMEM  fused heads+foot weight, resident across grid
    # b_ref : (1, N_OUT)  VMEM  fused bias, resident across grid
    # o_ref : (TB, N_OUT) VMEM  output block (f32)
    acc = jnp.dot(x_ref[...], w_ref[...], preferred_element_type=jnp.float32)
    o_ref[...] = jnp.maximum(acc + b_ref[...], 0.0)


@functools.partial(jax.jit, static_argnames=("tb", "compute_dtype"))
def consequent_net(x, w_heads, b_heads, w_foot, b_foot, *,
                   tb=8192, compute_dtype=jnp.bfloat16):
    """x: (B, n_brunch, n_h_fea) -> (B, 2) f32.

    w_heads: (n_brunch, n_h_fea)   row b = Linear_b.weight[0]
    b_heads: (n_brunch,)
    w_foot : (n_brunch, 2)         == Linear(n_brunch, 2).weight.T
    b_foot : (2,)
    """
    B, NB, H = x.shape
    K = NB * H

    wh = w_heads.astype(jnp.float32)
    bh = b_heads.astype(jnp.float32)
    wf = w_foot.astype(jnp.float32)
    bf = b_foot.astype(jnp.float32)

    # Fuse the 6 head linears and the foot linear into one (K, N_OUT) matrix.
    w_comb = (wh[:, :, None] * wf[:, None, :]).reshape(K, N_OUT)
    b_comb = (bh @ wf + bf).reshape(1, N_OUT)

    # Lane-dense 2-D input, fed to the kernel in compute_dtype (bf16 halves
    # the HBM read bytes; f32 gives exact parity with the reference).
    x2d = x.reshape(B, K).astype(compute_dtype)
    w_comb = w_comb.astype(compute_dtype)

    # Batch tiling: no wrapper-side padding. TB == B (full dim) is always a
    # legal block; otherwise TB is a multiple of 8 and the ragged last block
    # is masked by Pallas.
    tb_eff = max(8, (int(tb) // 8) * 8)
    TB = B if B <= tb_eff else tb_eff
    grid = (pl.cdiv(B, TB),)

    # Explicit scoped-VMEM budget: double-buffered x + output blocks using the
    # physical (lane-padded) layout, plus margin for weights/bias/compiler
    # scratch. Keeps v5e's 16 MiB default from shrinking the tile and stays
    # well inside v7x's 64 MiB physical VMEM.
    in_itemsize = jnp.dtype(compute_dtype).itemsize
    x_blk_bytes = TB * _round_up(K, 128) * in_itemsize
    o_blk_bytes = TB * _round_up(N_OUT, 128) * 4
    vmem_limit = int(2 * (x_blk_bytes + o_blk_bytes) + (8 << 20))

    out = pl.pallas_call(
        consequent_kernel,
        out_shape=jax.ShapeDtypeStruct((B, N_OUT), jnp.float32),
        grid_spec=pltpu.PrefetchScalarGridSpec(
            num_scalar_prefetch=0,
            grid=grid,
            in_specs=[
                # input block, pipelined (double-buffered) over the batch grid
                pl.BlockSpec((TB, K), lambda i: (i, 0)),
                # fused weight: full array, resident across all grid steps
                pl.BlockSpec((K, N_OUT), lambda i: (0, 0)),
                # fused bias: full array, resident across all grid steps
                pl.BlockSpec((1, N_OUT), lambda i: (0, 0)),
            ],
            out_specs=pl.BlockSpec((TB, N_OUT), lambda i: (i, 0)),
        ),
        compiler_params=pltpu.CompilerParams(
            dimension_semantics=_batch_axis_semantics(),
            vmem_limit_bytes=vmem_limit,
        ),
    )(x2d, w_comb, b_comb)

    return out


def reference(x, w_heads, b_heads, w_foot, b_foot):
    # Plain-JAX mirror of the PyTorch forward (two-step form).
    foot_in = jnp.einsum("nbh,bh->nb", x, w_heads) + b_heads[None, :]
    return jnp.maximum(foot_in @ w_foot + b_foot[None, :], 0.0)


if __name__ == "__main__":
    n_brunch = N_BRUNCH
    n_h_fea = 32
    batch = 8

    key = jax.random.PRNGKey(0)
    kx, kwh, kbh, kwf, kbf = jax.random.split(key, 5)

    x = jax.random.normal(kx, (batch, n_brunch, n_h_fea), dtype=jnp.float32)

    bound_h = 1.0 / jnp.sqrt(n_h_fea)
    w_heads = jax.random.uniform(kwh, (n_brunch, n_h_fea),
                                 minval=-bound_h, maxval=bound_h,
                                 dtype=jnp.float32)
    b_heads = jax.random.uniform(kbh, (n_brunch,),
                                 minval=-bound_h, maxval=bound_h,
                                 dtype=jnp.float32)

    bound_f = 1.0 / jnp.sqrt(n_brunch)
    # stored already transposed: (n_brunch, 2) == Linear(6, 2).weight.T
    w_foot = jax.random.uniform(kwf, (n_brunch, N_OUT),
                                minval=-bound_f, maxval=bound_f,
                                dtype=jnp.float32)
    b_foot = jax.random.uniform(kbf, (N_OUT,),
                                minval=-bound_f, maxval=bound_f,
                                dtype=jnp.float32)

    ref = reference(x, w_heads, b_heads, w_foot, b_foot)

    # Default fast path: bf16 input/weight stream, f32 MXU accumulation.
    out_bf16 = jax.block_until_ready(
        consequent_net(x, w_heads, b_heads, w_foot, b_foot))
    assert out_bf16.shape == (batch, N_OUT), out_bf16.shape
    assert jnp.allclose(out_bf16, ref, atol=5e-2, rtol=5e-2), (
        jnp.max(jnp.abs(out_bf16 - ref)))

    # Exact-parity path: full f32 input stream.
    out_f32 = jax.block_until_ready(
        consequent_net(x, w_heads, b_heads, w_foot, b_foot,
                       compute_dtype=jnp.float32))
    assert jnp.allclose(out_f32, ref, atol=1e-5, rtol=1e-5), (
        jnp.max(jnp.abs(out_f32 - ref)))

    print("KERNEL_OK")
</pallas_src>

<mosaic_0001>
module attributes {stable_mosaic.version = 11 : i64} {
  func.func @consequent_kernel(%arg0: i32, %arg1: memref<8x192xbf16, #tpu.memory_space<vmem>>, %arg2: memref<192x2xbf16, #tpu.memory_space<vmem>>, %arg3: memref<1x2xf32, #tpu.memory_space<vmem>>, %arg4: memref<8x2xf32, #tpu.memory_space<vmem>>) attributes {dimension_semantics = [#tpu.dimension_semantics<parallel>], iteration_bounds = array<i64: 1>, scalar_prefetch = 0 : i64, scratch_operands = 0 : i64, tpu.core_type = #tpu.core_type<tc>, window_params = [{transform_indices = @transform_0, window_bounds = array<i64: 8, 192>}, {pipeline_mode = #tpu.pipeline_mode<synchronous>, transform_indices = @transform_1, window_bounds = array<i64: 192, 2>}, {pipeline_mode = #tpu.pipeline_mode<synchronous>, transform_indices = @transform_2, window_bounds = array<i64: 1, 2>}, {transform_indices = @transform_3, window_bounds = array<i64: 8, 2>}]} {
    %c0 = arith.constant 0 : index
    %c0_0 = arith.constant 0 : index
    %0 = vector.load %arg1[%c0, %c0_0] : memref<8x192xbf16, #tpu.memory_space<vmem>>, vector<8x192xbf16>
    %c0_1 = arith.constant 0 : index
    %c0_2 = arith.constant 0 : index
    %1 = vector.load %arg2[%c0_1, %c0_2] : memref<192x2xbf16, #tpu.memory_space<vmem>>, vector<192x2xbf16>
    %cst = arith.constant dense<0.000000e+00> : vector<8x2xf32>
    %2 = tpu.matmul %0, %1, %cst {dimension_numbers = #tpu.dot_dimension_numbers<[1], [0], [0], [1], [0, 0, 1, 1], [], []>} : vector<8x192xbf16>, vector<192x2xbf16>, vector<8x2xf32> -> vector<8x2xf32>
    %c0_3 = arith.constant 0 : index
    %c0_4 = arith.constant 0 : index
    %3 = vector.load %arg3[%c0_3, %c0_4] : memref<1x2xf32, #tpu.memory_space<vmem>>, vector<1x2xf32>
    %4 = vector.broadcast %3 : vector<1x2xf32> to vector<8x2xf32>
    %5 = arith.addf %2, %4 : vector<8x2xf32>
    %cst_5 = arith.constant 0.000000e+00 : f32
    %6 = vector.broadcast %cst_5 : f32 to vector<8x2xf32>
    %7 = arith.maximumf %5, %6 : vector<8x2xf32>
    %c0_6 = arith.constant 0 : index
    %c0_7 = arith.constant 0 : index
    %8 = vector.load %arg4[%c0_6, %c0_7] : memref<8x2xf32, #tpu.memory_space<vmem>>, vector<8x2xf32>
    tpu.vector_store %arg4[%c0_6, %c0_7], %7 {strides = array<i32>} : memref<8x2xf32, #tpu.memory_space<vmem>>, vector<8x2xf32>,
    return
  }
  func.func @transform_0(%arg0: i32) -> (i32, i32) {
    %c0_i32 = arith.constant 0 : i32
    %c0_i32_0 = arith.constant 0 : i32
    return %arg0, %c0_i32 : i32, i32
  }
  func.func @transform_1(%arg0: i32) -> (i32, i32) {
    %c0_i32 = arith.constant 0 : i32
    %c0_i32_0 = arith.constant 0 : i32
    %c0_i32_1 = arith.constant 0 : i32
    return %c0_i32, %c0_i32_0 : i32, i32
  }
  func.func @transform_2(%arg0: i32) -> (i32, i32) {
    %c0_i32 = arith.constant 0 : i32
    %c0_i32_0 = arith.constant 0 : i32
    %c0_i32_1 = arith.constant 0 : i32
    return %c0_i32, %c0_i32_0 : i32, i32
  }
  func.func @transform_3(%arg0: i32) -> (i32, i32) {
    %c0_i32 = arith.constant 0 : i32
    %c0_i32_0 = arith.constant 0 : i32
    return %arg0, %c0_i32 : i32, i32
  }
}

</mosaic_0001>

<llo_original>
// kernel: consequent_net.1
$region0: #{consequent_net.1}
  #allocation0 [shape = 'u32[]', space=smem, size = 0x4, offset = 0x4, fixed_abs, tag = 'smem constant byte address 0x4 - core index']
  #allocation1 [shape = 'u32[144,128]{1,0:T(1,128)}', space=vmem, size = 0x12000, scoped, tag = 'internal scratch']
  %s0 = inlined_call_operand.vmem [shape: bf16[8,192], index: 0, kind: input, shape index: {}]
  %s1 = inlined_call_operand.vmem [shape: bf16[192,2], index: 1, kind: input, shape index: {}]
  %s2 = inlined_call_operand.vmem [shape: f32[1,2], index: 2, kind: input, shape index: {}]
  %s3 = inlined_call_operand.vmem [shape: f32[8,2], index: 3, kind: output, shape index: {}]
  %s4 = sld [smem:[#allocation0]]
  $region22: #{consequent_net.1} parent=0
    _
  %s6 = ssub.s32 1, %s4
  %s7 = scalar_select 0, %s6, %s4
  // Predicated region
  $region2: #{consequent_net.1} parent=0 // pred_check
    _
  $region3: #{consequent_net.1} parent=0 // pred_check_branch
    %9 = sbr.rel (0) target = $region5
  $region4: #{consequent_net.1} parent=0 // pred_region
    _
  $region5: #{consequent_net.1} parent=0 // pred_fallthru
    _
  // Predicated region
  $region6: #{consequent_net.1} parent=0 // pred_check
    _
  $region7: #{consequent_net.1} parent=0 // pred_check_branch
    %11 = sbr.rel (0) target = $region9
  $region8: #{consequent_net.1} parent=0 // pred_region
    _
  $region9: #{consequent_net.1} parent=0 // pred_fallthru
    _
  // Predicated region
  $region10: #{consequent_net.1} parent=0 // pred_check
    _
  $region11: #{consequent_net.1} parent=0 // pred_check_branch
    %13 = sbr.rel (0) target = $region13
  $region12: #{consequent_net.1} parent=0 // pred_region
    _
  $region13: #{consequent_net.1} parent=0 // pred_fallthru
    _
  %v15 = vld [vmem:[%s0] sm:$0xff]
  %v16 = vld [vmem:[%s1] sm:$0xf]
  %v17 = vld [vmem:[%s1 + $0x4] sm:$0xf]
  %v18 = vld [vmem:[%s1 + $0x8] sm:$0xf]
  %v19 = vld [vmem:[%s1 + $0xc] sm:$0xf]
  %v20 = vld [vmem:[%s1 + $0x10] sm:$0xf]
  %v21 = vld [vmem:[%s1 + $0x14] sm:$0xf]
  %v22 = vld [vmem:[%s1 + $0x18] sm:$0xf]
  %v23 = vld [vmem:[%s1 + $0x1c] sm:$0xf]
  %v24 = vld [vmem:[%s1 + $0x20] sm:$0xf]
  %v25 = vld [vmem:[%s1 + $0x24] sm:$0xf]
  %v26 = vld [vmem:[%s1 + $0x28] sm:$0xf]
  %v27 = vld [vmem:[%s1 + $0x2c] sm:$0xf]
  %v28 = vld [vmem:[%s1 + $0x30] sm:$0xf]
  %v29 = vld [vmem:[%s1 + $0x34] sm:$0xf]
  %v30 = vld [vmem:[%s1 + $0x38] sm:$0xf]
  %v31 = vld [vmem:[%s1 + $0x3c] sm:$0xf]
  %v32 = vld [vmem:[%s1 + $0x40] sm:$0xf]
  %v33 = vld [vmem:[%s1 + $0x44] sm:$0xf]
  %v34 = vld [vmem:[%s1 + $0x48] sm:$0xf]
  %v35 = vld [vmem:[%s1 + $0x4c] sm:$0xf]
  %v36 = vld [vmem:[%s1 + $0x50] sm:$0xf]
  %v37 = vld [vmem:[%s1 + $0x54] sm:$0xf]
  %v38 = vld [vmem:[%s1 + $0x58] sm:$0xf]
  %v39 = vld [vmem:[%s1 + $0x5c] sm:$0xf]
  %v40 = vld [vmem:[%s2] sm:$0x1]
  %v42 = vlaneseq
  %v43 = vshrl.u32 %v42, 7
  %v44 = vsub.s32 0, %v43
  %v45 = vrot.slane %v40, %v44
  %v48 = vunpack.c.l.b16 %v15
  %v49 = vunpack.c.h.b16 %v15
  %v50 = vpack.c.b16 %v48, %v48
  %v51 = vpack.c.b16 %v49, %v49
  %v77 = vunpack.c.l.b16 %v16
  %v78 = vunpack.c.l.b16 %v17
  %v79 = vunpack.c.l.b16 %v18
  %v80 = vunpack.c.l.b16 %v19
  %v81 = vunpack.c.l.b16 %v20
  %v82 = vunpack.c.l.b16 %v21
  %v83 = vunpack.c.l.b16 %v22
  %v84 = vunpack.c.l.b16 %v23
  %v85 = vunpack.c.l.b16 %v24
  %v86 = vunpack.c.l.b16 %v25
  %v87 = vunpack.c.l.b16 %v26
  %v88 = vunpack.c.l.b16 %v27
  %v89 = vunpack.c.l.b16 %v28
  %v90 = vunpack.c.l.b16 %v29
  %v91 = vunpack.c.l.b16 %v30
  %v92 = vunpack.c.l.b16 %v31
  %v93 = vunpack.c.l.b16 %v32
  %v94 = vunpack.c.l.b16 %v33
  %v95 = vunpack.c.l.b16 %v34
  %v96 = vunpack.c.l.b16 %v35
  %v97 = vunpack.c.l.b16 %v36
  %v98 = vunpack.c.l.b16 %v37
  %v99 = vunpack.c.l.b16 %v38
  %v100 = vunpack.c.l.b16 %v39
  %v101 = vpack.c.b16 %v78, %v77
  %v102 = vpack.c.b16 %v80, %v79
  %v103 = vpack.c.b16 %v82, %v81
  %v104 = vpack.c.b16 %v84, %v83
  %v105 = vpack.c.b16 %v86, %v85
  %v106 = vpack.c.b16 %v88, %v87
  %v107 = vpack.c.b16 %v90, %v89
  %v108 = vpack.c.b16 %v92, %v91
  %v109 = vpack.c.b16 %v94, %v93
  %v110 = vpack.c.b16 %v96, %v95
  %v111 = vpack.c.b16 %v98, %v97
  %v112 = vpack.c.b16 %v100, %v99
  %vm125 = vcmask 523264
  %v127 = vsel %vm125, %v51, 0
  %129 = vmatprep.subr.bf16.mxu0 0
  %130 = vmatpush1.bf16.msra.mxu0 %v101
  %131 = vmatprep.subr.bf16.mxu0 0
  %132 = vmatpush1.bf16.msra.mxu0 %v102
  %133 = vmatprep.subr.bf16.mxu0 0
  %134 = vmatpush1.bf16.msra.mxu0 %v103
  %135 = vmatprep.subr.bf16.mxu0 0
  %136 = vmatpush1.bf16.msra.mxu0 %v104
  %137 = vmatprep.subr.bf16.mxu0 0
  %138 = vmatpush1.bf16.msra.mxu0 %v105
  %139 = vmatprep.subr.bf16.mxu0 0
  %140 = vmatpush1.bf16.msra.mxu0 %v106
  %141 = vmatprep.subr.bf16.mxu0 0
  %142 = vmatpush1.bf16.msra.mxu0 %v107
  %143 = vmatprep.subr.bf16.mxu0 0
  %144 = vmatpush1.bf16.msra.mxu0 %v108
  %145 = vmatprep.subr.bf16.mxu0 0
  %146 = vmatpush1.bf16.msra.mxu0 %v109
  %147 = vmatprep.subr.bf16.mxu0 0
  %148 = vmatpush1.bf16.msra.mxu0 %v110
  %149 = vmatprep.subr.bf16.mxu0 0
  %150 = vmatpush1.bf16.msra.mxu0 %v111
  %151 = vmatprep.subr.bf16.mxu0 0
  %152 = vmatpush1.bf16.msra.mxu0 %v112
  %153 = vmatprep.subr.bf16.mxu0 0
  %154 = vmatpush1.bf16.msra.mxu0 0
  %155 = vmatprep.subr.bf16.mxu0 0
  %156 = vmatpush1.bf16.msra.mxu0 0
  %157 = vmatprep.subr.bf16.mxu0 0
  %158 = vmatpush1.bf16.msra.mxu0 0
  %159 = vmatprep.subr.bf16.mxu0 0
  %160 = vmatpush1.bf16.msra.mxu0 0
  %161 = vmatprep.mubr.bf16.mxu0 %v127
  %162 = vmatmul.mubr.bf16.gmra.mrb[0].mxu0 %v50
  %v163 = vpop.f32.mrb[0].mxu0
  %v164 = vadd.f32 %v45, %v163
  %v165 = vpop.f32.mrb[0].mxu0
  %v166 = vpop.f32.mrb[0].mxu0
  %v167 = vpop.f32.mrb[0].mxu0
  %168 = vdwg.mxu0
  %v169 = vmax.f32 %v164, 0.0
  %vm170 = vcmask 15360
  %171 = vst.msk [vmem:[%s3] sm:$0xff] %vm170, %v169
  // Predicated region
  $region14: #{consequent_net.1} parent=0 // pred_check
    _
  $region15: #{consequent_net.1} parent=0 // pred_check_branch
    %173 = sbr.rel (0) target = $region17
  $region16: #{consequent_net.1} parent=0 // pred_region
    _
  $region17: #{consequent_net.1} parent=0 // pred_fallthru
    _
  // Predicated region
  $region18: #{consequent_net.1} parent=0 // pred_check
    _
  $region19: #{consequent_net.1} parent=0 // pred_check_branch
    %175 = sbr.rel (0) target = $region21
  $region20: #{consequent_net.1} parent=0 // pred_region
    _
  $region21: #{consequent_net.1} parent=0 // pred_fallthru
    _

</llo_original>
